<compile_context>
chip_gen: v7x
topology: tpu7x:2x2x1
jax: 0.10.0
libtpu: 0.0.40
codegen_flags: <defaults>
</compile_context>

<pallas_src>
import functools

import jax
import jax.numpy as jnp
import numpy as np
from jax.experimental import pallas as pl
from jax.experimental.pallas import tpu as pltpu

EPS = 1e-5  # nn.BatchNorm2d default eps


def _round_up(a, b):
    return (a + b - 1) // b * b


def _matmul_stats_kernel(wt_ref, p_ref, z_ref, ssum_ref, ssq_ref):
    """Phase 1: conv-transpose matmul tile + per-image per-channel batch-stat partials."""
    @pl.when(pl.program_id(1) == 0)
    def _():
        ssum_ref[...] = jnp.zeros_like(ssum_ref)
        ssq_ref[...] = jnp.zeros_like(ssq_ref)

    acc = jnp.dot(wt_ref[...], p_ref[0],
                  preferred_element_type=jnp.float32)              # [Cout, TS] f32
    z_ref[0] = acc.astype(z_ref.dtype)                             # bf16 store: halves z traffic
    ssum_ref[...] += jnp.sum(acc, axis=1, keepdims=True)[None]     # [1, Cout, 1] (f32 stats)
    ssq_ref[...] += jnp.sum(acc * acc, axis=1, keepdims=True)[None]


def _bn_silu_kernel(z_ref, scale_ref, shift_ref, o_ref):
    """Phase 2: y = z*scale + shift ; SiLU via EUP exp + approx reciprocal."""
    y = z_ref[0].astype(jnp.float32) * scale_ref[...] + shift_ref[...]
    o_ref[0] = (y * pl.reciprocal(1.0 + jnp.exp(-y), approx=True)).astype(o_ref.dtype)


def conv_block_t_forward(x, weight, bias, gamma, beta, *, stride, padding, tm=1024):
    """x: [N, Cin, H, W] NCHW. weight: [Cin, Cout, K, K] (PyTorch ConvTranspose2d layout)."""
    del bias  # exactly cancelled by the training-mode BatchNorm that follows
    N, Cin, H, W = x.shape
    _, Cout, K, _ = weight.shape
    assert padding <= K - 1, "wrapper assumes padding <= kernel_size - 1"
    OH = (H - 1) * stride - 2 * padding + K
    OW = (W - 1) * stride - 2 * padding + K
    OHW = OH * OW
    M = N * OHW
    Kdim = K * K * Cin
    kdim_p = _round_up(Kdim, 16)           # bf16 sublane packing

    # Lane tile: multiple of 128, sized against a conservative (v7x-safe) VMEM budget.
    ts = max(128, (min(int(tm), _round_up(OHW, 128)) // 128) * 128)

    def _vmem_need(t):
        # double-buffered patch(bf16) + z(bf16) + out(f32) tiles + weights + stats (upper bound)
        return 2 * t * (2 * kdim_p + 6 * Cout) + 4 * Cout * kdim_p + (1 << 16)

    budget = 20 * 1024 * 1024              # fits v7x's 64 MiB physical / 32 MiB scoped VMEM
    while ts > 128 and _vmem_need(ts) > budget:
        ts -= 128
    ohw_p = _round_up(OHW, ts)
    n_tiles = ohw_p // ts

    def _params(sem):
        kw = dict(dimension_semantics=sem)
        if _vmem_need(ts) > 14 * 1024 * 1024:      # above v5e's 16 MiB scoped default
            kw["vmem_limit_bytes"] = 40 * 1024 * 1024
        return pltpu.CompilerParams(**kw)

    # ---- layout glue (plain JAX, all bf16): zero-stuff, pad, transposed im2col, flip kernel ----
    xb = x.astype(jnp.bfloat16)
    Hs, Ws = (H - 1) * stride + 1, (W - 1) * stride + 1
    stuffed = jnp.zeros((N, Cin, Hs, Ws), jnp.bfloat16).at[:, :, ::stride, ::stride].set(xb)
    pe = K - 1 - padding
    xs = jnp.pad(stuffed, ((0, 0), (0, 0), (pe, pe), (pe, pe)))

    # patch[n, (kh*K+kw)*Cin + ci, oh*OW + ow]
    slices = [xs[:, :, kh:kh + OH, kw:kw + OW] for kh in range(K) for kw in range(K)]
    patch = jnp.stack(slices, axis=1).reshape(N, Kdim, OHW)            # bf16
    patch = jnp.pad(patch, ((0, 0), (0, kdim_p - Kdim), (0, ohw_p - OHW)))

    # w_t[co, (kh*K+kw)*Cin + ci] = weight[ci, co, K-1-kh, K-1-kw]
    w_t = jnp.transpose(weight[:, :, ::-1, ::-1], (1, 2, 3, 0)).reshape(Cout, Kdim)
    w_t = jnp.pad(w_t.astype(jnp.bfloat16), ((0, 0), (0, kdim_p - Kdim)))

    # ---- phase 1: tiled matmul + per-image per-channel partial stats ----
    z, ssum, ssq = pl.pallas_call(
        _matmul_stats_kernel,
        out_shape=(jax.ShapeDtypeStruct((N, Cout, ohw_p), jnp.bfloat16),
                   jax.ShapeDtypeStruct((N, Cout, 1), jnp.float32),
                   jax.ShapeDtypeStruct((N, Cout, 1), jnp.float32)),
        grid=(N, n_tiles),
        in_specs=[pl.BlockSpec((Cout, kdim_p), lambda n, j: (0, 0)),
                  pl.BlockSpec((1, kdim_p, ts), lambda n, j: (n, 0, j))],
        out_specs=(pl.BlockSpec((1, Cout, ts), lambda n, j: (n, 0, j)),
                   pl.BlockSpec((1, Cout, 1), lambda n, j: (n, 0, 0)),
                   pl.BlockSpec((1, Cout, 1), lambda n, j: (n, 0, 0))),
        compiler_params=_params(("parallel", "arbitrary")),   # per-image stats => batch axis parallel
    )(w_t, patch)

    # ---- tiny BN finalize (per-channel scalars, plain JAX) ----
    ssum_t = jnp.sum(ssum, axis=0)                         # [Cout, 1]
    ssq_t = jnp.sum(ssq, axis=0)                           # [Cout, 1]
    mean = ssum_t / M
    var = jnp.maximum(ssq_t / M - mean * mean, 0.0)        # biased (training-mode) variance
    scale = gamma.reshape(Cout, 1).astype(jnp.float32) * jax.lax.rsqrt(var + EPS)
    shift = beta.reshape(Cout, 1).astype(jnp.float32) - mean * scale

    # ---- phase 2: tiled normalize + SiLU, written directly in NCHW-adjacent layout ----
    out = pl.pallas_call(
        _bn_silu_kernel,
        out_shape=jax.ShapeDtypeStruct((N, Cout, ohw_p), jnp.float32),
        grid=(N, n_tiles),
        in_specs=[pl.BlockSpec((1, Cout, ts), lambda n, j: (n, 0, j)),
                  pl.BlockSpec((Cout, 1), lambda n, j: (0, 0)),
                  pl.BlockSpec((Cout, 1), lambda n, j: (0, 0))],
        out_specs=pl.BlockSpec((1, Cout, ts), lambda n, j: (n, 0, j)),
        compiler_params=_params(("parallel", "parallel")),   # independent tiles: 2 TCs on v7x
    )(z, scale, shift)

    # ohw_p == OHW whenever OH*OW is a multiple of the tile (e.g. power-of-two spatial dims),
    # in which case the slice below is a no-op and no extra HBM pass happens.
    return out[:, :, :OHW].reshape(N, Cout, OH, OW)


def ref_forward(x, weight, bias, gamma, beta, stride, padding, eps=EPS):
    """Pure numpy reference implementing PyTorch semantics directly (f64)."""
    N, Cin, H, W = x.shape
    _, Cout, K, _ = weight.shape
    OH = (H - 1) * stride - 2 * padding + K
    OW = (W - 1) * stride - 2 * padding + K
    out = np.zeros((N, Cout, OH, OW), np.float64)
    for n in range(N):
        for ci in range(Cin):
            for ih in range(H):
                for iw in range(W):
                    for kh in range(K):
                        for kw in range(K):
                            oh = ih * stride - padding + kh
                            ow = iw * stride - padding + kw
                            if 0 <= oh < OH and 0 <= ow < OW:
                                out[n, :, oh, ow] += x[n, ci, ih, iw] * weight[ci, :, kh, kw]
    out += bias[None, :, None, None]
    mean = out.mean(axis=(0, 2, 3), keepdims=True)
    var = out.var(axis=(0, 2, 3), keepdims=True)   # biased variance (training-mode BN)
    y = gamma[None, :, None, None] * (out - mean) / np.sqrt(var + eps) + beta[None, :, None, None]
    return (y / (1.0 + np.exp(-y))).astype(np.float32)


if __name__ == "__main__":
    key = jax.random.PRNGKey(0)
    N, Cin, H, W = 2, 4, 16, 16
    Cout, K, stride, pad = 8, 3, 2, 1

    k1, k2, k3, k4, k5 = jax.random.split(key, 5)
    x = jax.random.normal(k1, (N, Cin, H, W), jnp.float32)
    weight = 0.1 * jax.random.normal(k2, (Cin, Cout, K, K), jnp.float32)   # ConvTranspose2d weight
    bias = 0.1 * jax.random.normal(k3, (Cout,), jnp.float32)               # ConvTranspose2d bias
    gamma = 1.0 + 0.1 * jax.random.normal(k4, (Cout,), jnp.float32)        # BN weight
    beta = 0.1 * jax.random.normal(k5, (Cout,), jnp.float32)               # BN bias

    fwd = jax.jit(functools.partial(conv_block_t_forward, stride=stride, padding=pad))
    out = jax.block_until_ready(fwd(x, weight, bias, gamma, beta))

    ref = ref_forward(np.asarray(x), np.asarray(weight), np.asarray(bias),
                      np.asarray(gamma), np.asarray(beta), stride, pad)
    # Tolerance sized for the bf16 contraction + bf16 z round trip (f32 accumulation/stats).
    np.testing.assert_allclose(np.asarray(out), ref, rtol=5e-2, atol=5e-2)
    print("KERNEL_OK")
</pallas_src>

<mosaic_0001>
module attributes {stable_mosaic.version = 11 : i64} {
  func.func @_matmul_stats_kernel(%arg0: i32, %arg1: i32, %arg2: memref<8x48xbf16, #tpu.memory_space<vmem>>, %arg3: memref<1x48x1024xbf16, #tpu.memory_space<vmem>>, %arg4: memref<1x8x1024xbf16, #tpu.memory_space<vmem>>, %arg5: memref<1x8x1xf32, #tpu.memory_space<vmem>>, %arg6: memref<1x8x1xf32, #tpu.memory_space<vmem>>) attributes {dimension_semantics = [#tpu.dimension_semantics<parallel>, #tpu.dimension_semantics<arbitrary>], iteration_bounds = array<i64: 2, 1>, scalar_prefetch = 0 : i64, scratch_operands = 0 : i64, tpu.core_type = #tpu.core_type<tc>, window_params = [{pipeline_mode = #tpu.pipeline_mode<synchronous>, transform_indices = @transform_0, window_bounds = array<i64: 8, 48>}, {transform_indices = @transform_1, window_bounds = array<i64: 1, 48, 1024>}, {transform_indices = @transform_2, window_bounds = array<i64: 1, 8, 1024>}, {transform_indices = @transform_3, window_bounds = array<i64: 1, 8, 1>}, {transform_indices = @transform_4, window_bounds = array<i64: 1, 8, 1>}]} {
    %c0_i32 = arith.constant 0 : i32
    %0 = arith.cmpi eq, %arg1, %c0_i32 : i32
    %1 = arith.extui %0 : i1 to i32
    %c0_i32_0 = arith.constant 0 : i32
    %2 = arith.cmpi ne, %1, %c0_i32_0 : i32
    scf.if %2 {
      %cst_22 = arith.constant 0.000000e+00 : f32
      %24 = vector.broadcast %cst_22 : f32 to vector<1x8x1xf32>
      %c0_23 = arith.constant 0 : index
      %c0_24 = arith.constant 0 : index
      %c0_25 = arith.constant 0 : index
      %25 = vector.load %arg5[%c0_23, %c0_24, %c0_25] : memref<1x8x1xf32, #tpu.memory_space<vmem>>, vector<1x8x1xf32>
      tpu.vector_store %arg5[%c0_23, %c0_24, %c0_25], %24 {strides = array<i32>} : memref<1x8x1xf32, #tpu.memory_space<vmem>>, vector<1x8x1xf32>,
      %cst_26 = arith.constant 0.000000e+00 : f32
      %26 = vector.broadcast %cst_26 : f32 to vector<1x8x1xf32>
      %c0_27 = arith.constant 0 : index
      %c0_28 = arith.constant 0 : index
      %c0_29 = arith.constant 0 : index
      %27 = vector.load %arg6[%c0_27, %c0_28, %c0_29] : memref<1x8x1xf32, #tpu.memory_space<vmem>>, vector<1x8x1xf32>
      tpu.vector_store %arg6[%c0_27, %c0_28, %c0_29], %26 {strides = array<i32>} : memref<1x8x1xf32, #tpu.memory_space<vmem>>, vector<1x8x1xf32>,
    } else {
    }
    %c0 = arith.constant 0 : index
    %c0_1 = arith.constant 0 : index
    %3 = vector.load %arg2[%c0, %c0_1] : memref<8x48xbf16, #tpu.memory_space<vmem>>, vector<8x48xbf16>
    %c0_2 = arith.constant 0 : index
    %c0_3 = arith.constant 0 : index
    %c0_4 = arith.constant 0 : index
    %4 = vector.load %arg3[%c0_2, %c0_3, %c0_4] : memref<1x48x1024xbf16, #tpu.memory_space<vmem>>, vector<1x48x1024xbf16>
    %5 = vector.shape_cast %4 : vector<1x48x1024xbf16> to vector<48x1024xbf16>
    %cst = arith.constant dense<0.000000e+00> : vector<8x1024xf32>
    %6 = tpu.matmul %3, %5, %cst {dimension_numbers = #tpu.dot_dimension_numbers<[1], [0], [0], [1], [0, 0, 1, 1], [], []>} : vector<8x48xbf16>, vector<48x1024xbf16>, vector<8x1024xf32> -> vector<8x1024xf32>
    %7 = arith.truncf %6 : vector<8x1024xf32> to vector<8x1024xbf16>
    %c0_5 = arith.constant 0 : index
    %c0_6 = arith.constant 0 : index
    %c0_7 = arith.constant 0 : index
    %8 = vector.load %arg4[%c0_5, %c0_6, %c0_7] : memref<1x8x1024xbf16, #tpu.memory_space<vmem>>, vector<1x8x1024xbf16>
    %9 = vector.shape_cast %8 : vector<1x8x1024xbf16> to vector<8x1024xbf16>
    %10 = vector.shape_cast %7 : vector<8x1024xbf16> to vector<1x8x1024xbf16>
    tpu.vector_store %arg4[%c0_5, %c0_6, %c0_7], %10 {strides = array<i32>} : memref<1x8x1024xbf16, #tpu.memory_space<vmem>>, vector<1x8x1024xbf16>,
    %c0_8 = arith.constant 0 : index
    %c0_9 = arith.constant 0 : index
    %c0_10 = arith.constant 0 : index
    %11 = vector.load %arg5[%c0_8, %c0_9, %c0_10] : memref<1x8x1xf32, #tpu.memory_space<vmem>>, vector<1x8x1xf32>
    %cst_11 = arith.constant dense<0.000000e+00> : vector<8xf32>
    %12 = vector.multi_reduction <add>, %6, %cst_11 [1] : vector<8x1024xf32> to vector<8xf32>
    %13 = vector.shape_cast %12 : vector<8xf32> to vector<8x1xf32>
    %14 = vector.shape_cast %13 : vector<8x1xf32> to vector<1x8x1xf32>
    %15 = arith.addf %11, %14 : vector<1x8x1xf32>
    %c0_12 = arith.constant 0 : index
    %c0_13 = arith.constant 0 : index
    %c0_14 = arith.constant 0 : index
    %16 = vector.load %arg5[%c0_12, %c0_13, %c0_14] : memref<1x8x1xf32, #tpu.memory_space<vmem>>, vector<1x8x1xf32>
    tpu.vector_store %arg5[%c0_12, %c0_13, %c0_14], %15 {strides = array<i32>} : memref<1x8x1xf32, #tpu.memory_space<vmem>>, vector<1x8x1xf32>,
    %c0_15 = arith.constant 0 : index
    %c0_16 = arith.constant 0 : index
    %c0_17 = arith.constant 0 : index
    %17 = vector.load %arg6[%c0_15, %c0_16, %c0_17] : memref<1x8x1xf32, #tpu.memory_space<vmem>>, vector<1x8x1xf32>
    %18 = arith.mulf %6, %6 : vector<8x1024xf32>
    %cst_18 = arith.constant dense<0.000000e+00> : vector<8xf32>
    %19 = vector.multi_reduction <add>, %18, %cst_18 [1] : vector<8x1024xf32> to vector<8xf32>
    %20 = vector.shape_cast %19 : vector<8xf32> to vector<8x1xf32>
    %21 = vector.shape_cast %20 : vector<8x1xf32> to vector<1x8x1xf32>
    %22 = arith.addf %17, %21 : vector<1x8x1xf32>
    %c0_19 = arith.constant 0 : index
    %c0_20 = arith.constant 0 : index
    %c0_21 = arith.constant 0 : index
    %23 = vector.load %arg6[%c0_19, %c0_20, %c0_21] : memref<1x8x1xf32, #tpu.memory_space<vmem>>, vector<1x8x1xf32>
    tpu.vector_store %arg6[%c0_19, %c0_20, %c0_21], %22 {strides = array<i32>} : memref<1x8x1xf32, #tpu.memory_space<vmem>>, vector<1x8x1xf32>,
    return
  }
  func.func @transform_0(%arg0: i32, %arg1: i32) -> (i32, i32) {
    %c0_i32 = arith.constant 0 : i32
    %c0_i32_0 = arith.constant 0 : i32
    %c0_i32_1 = arith.constant 0 : i32
    return %c0_i32, %c0_i32_0 : i32, i32
  }
  func.func @transform_1(%arg0: i32, %arg1: i32) -> (i32, i32, i32) {
    %c0_i32 = arith.constant 0 : i32
    %c0_i32_0 = arith.constant 0 : i32
    return %arg0, %c0_i32, %arg1 : i32, i32, i32
  }
  func.func @transform_2(%arg0: i32, %arg1: i32) -> (i32, i32, i32) {
    %c0_i32 = arith.constant 0 : i32
    %c0_i32_0 = arith.constant 0 : i32
    return %arg0, %c0_i32, %arg1 : i32, i32, i32
  }
  func.func @transform_3(%arg0: i32, %arg1: i32) -> (i32, i32, i32) {
    %c0_i32 = arith.constant 0 : i32
    %c0_i32_0 = arith.constant 0 : i32
    %c0_i32_1 = arith.constant 0 : i32
    return %arg0, %c0_i32, %c0_i32_0 : i32, i32, i32
  }
  func.func @transform_4(%arg0: i32, %arg1: i32) -> (i32, i32, i32) {
    %c0_i32 = arith.constant 0 : i32
    %c0_i32_0 = arith.constant 0 : i32
    %c0_i32_1 = arith.constant 0 : i32
    return %arg0, %c0_i32, %c0_i32_0 : i32, i32, i32
  }
}

module attributes {stable_mosaic.version = 11 : i64} {
  func.func @_bn_silu_kernel(%arg0: i32, %arg1: i32, %arg2: memref<1x8x1024xbf16, #tpu.memory_space<vmem>>, %arg3: memref<8x1xf32, #tpu.memory_space<vmem>>, %arg4: memref<8x1xf32, #tpu.memory_space<vmem>>, %arg5: memref<1x8x1024xf32, #tpu.memory_space<vmem>>) attributes {dimension_semantics = [#tpu.dimension_semantics<parallel>, #tpu.dimension_semantics<parallel>], iteration_bounds = array<i64: 2, 1>, scalar_prefetch = 0 : i64, scratch_operands = 0 : i64, tpu.core_type = #tpu.core_type<tc>, window_params = [{transform_indices = @transform_0, window_bounds = array<i64: 1, 8, 1024>}, {pipeline_mode = #tpu.pipeline_mode<synchronous>, transform_indices = @transform_1, window_bounds = array<i64: 8, 1>}, {pipeline_mode = #tpu.pipeline_mode<synchronous>, transform_indices = @transform_2, window_bounds = array<i64: 8, 1>}, {transform_indices = @transform_3, window_bounds = array<i64: 1, 8, 1024>}]} {
    %c0 = arith.constant 0 : index
    %c0_0 = arith.constant 0 : index
    %c0_1 = arith.constant 0 : index
    %0 = vector.load %arg2[%c0, %c0_0, %c0_1] : memref<1x8x1024xbf16, #tpu.memory_space<vmem>>, vector<1x8x1024xbf16>
    %1 = vector.shape_cast %0 : vector<1x8x1024xbf16> to vector<8x1024xbf16>
    %2 = arith.extf %1 : vector<8x1024xbf16> to vector<8x1024xf32>
    %c0_2 = arith.constant 0 : index
    %c0_3 = arith.constant 0 : index
    %3 = vector.load %arg3[%c0_2, %c0_3] : memref<8x1xf32, #tpu.memory_space<vmem>>, vector<8x1xf32>
    %4 = vector.broadcast %3 : vector<8x1xf32> to vector<8x1024xf32>
    %5 = arith.mulf %2, %4 : vector<8x1024xf32>
    %c0_4 = arith.constant 0 : index
    %c0_5 = arith.constant 0 : index
    %6 = vector.load %arg4[%c0_4, %c0_5] : memref<8x1xf32, #tpu.memory_space<vmem>>, vector<8x1xf32>
    %7 = vector.broadcast %6 : vector<8x1xf32> to vector<8x1024xf32>
    %8 = arith.addf %5, %7 : vector<8x1024xf32>
    %cst = arith.constant 0.000000e+00 : f32
    %9 = vector.broadcast %cst : f32 to vector<8x1024xf32>
    %10 = arith.subf %9, %8 : vector<8x1024xf32>
    %11 = math.exp %10 : vector<8x1024xf32>
    %cst_6 = arith.constant 1.000000e+00 : f32
    %12 = vector.broadcast %cst_6 : f32 to vector<8x1024xf32>
    %13 = arith.addf %12, %11 : vector<8x1024xf32>
    %14 = tpu.reciprocal %13 {approx = true} : vector<8x1024xf32> -> vector<8x1024xf32>
    %15 = arith.mulf %8, %14 : vector<8x1024xf32>
    %c0_7 = arith.constant 0 : index
    %c0_8 = arith.constant 0 : index
    %c0_9 = arith.constant 0 : index
    %16 = vector.load %arg5[%c0_7, %c0_8, %c0_9] : memref<1x8x1024xf32, #tpu.memory_space<vmem>>, vector<1x8x1024xf32>
    %17 = vector.shape_cast %16 : vector<1x8x1024xf32> to vector<8x1024xf32>
    %18 = vector.shape_cast %15 : vector<8x1024xf32> to vector<1x8x1024xf32>
    tpu.vector_store %arg5[%c0_7, %c0_8, %c0_9], %18 {strides = array<i32>} : memref<1x8x1024xf32, #tpu.memory_space<vmem>>, vector<1x8x1024xf32>,
    return
  }
  func.func @transform_0(%arg0: i32, %arg1: i32) -> (i32, i32, i32) {
    %c0_i32 = arith.constant 0 : i32
    %c0_i32_0 = arith.constant 0 : i32
    return %arg0, %c0_i32, %arg1 : i32, i32, i32
  }
  func.func @transform_1(%arg0: i32, %arg1: i32) -> (i32, i32) {
    %c0_i32 = arith.constant 0 : i32
    %c0_i32_0 = arith.constant 0 : i32
    %c0_i32_1 = arith.constant 0 : i32
    return %c0_i32, %c0_i32_0 : i32, i32
  }
  func.func @transform_2(%arg0: i32, %arg1: i32) -> (i32, i32) {
    %c0_i32 = arith.constant 0 : i32
    %c0_i32_0 = arith.constant 0 : i32
    %c0_i32_1 = arith.constant 0 : i32
    return %c0_i32, %c0_i32_0 : i32, i32
  }
  func.func @transform_3(%arg0: i32, %arg1: i32) -> (i32, i32, i32) {
    %c0_i32 = arith.constant 0 : i32
    %c0_i32_0 = arith.constant 0 : i32
    return %arg0, %c0_i32, %arg1 : i32, i32, i32
  }
}

</mosaic_0001>

<llo_original>
// kernel: conv_block_t_forward.3
$region0: #{conv_block_t_forward.3}
  #allocation0 [shape = 'u32[]', space=smem, size = 0x4, offset = 0x4, fixed_abs, tag = 'smem constant byte address 0x4 - core index']
  #allocation1 [shape = 'u32[144,128]{1,0:T(1,128)}', space=vmem, size = 0x12000, scoped, tag = 'internal scratch']
  %s0 = inlined_call_operand.vmem [shape: bf16[2,8,1024], index: 0, kind: input, shape index: {}]
  %s1 = inlined_call_operand.vmem [shape: f32[8,1], index: 1, kind: input, shape index: {}]
  %s2 = inlined_call_operand.vmem [shape: f32[8,1], index: 2, kind: input, shape index: {}]
  %s3 = inlined_call_operand.vmem [shape: f32[2,8,1024], index: 3, kind: output, shape index: {}]
  %s4 = sld [smem:[#allocation0]]
  $region45: #{conv_block_t_forward.3} parent=0
    _
  %s6 = ssub.s32 1, %s4
  %s7 = scalar_select 0, %s6, %s4
  loop: start=0, step=1, limit=4
  $region2: #{conv_block_t_forward.3} parent=0 // loop_pre_header
    _
  $region3: #{conv_block_t_forward.3} parent=0 // loop_header
    %s9 = sphi 0, %s13
    %p10 = scmp.ge.s32.totalorder %s9, 4
    %s16 = sphi 0, %s28
    %s17 = sphi 0, %s24
    %s18 = sphi 0, %s16
    %s19 = sphi 0, %s17
    %s20 = sphi 0, %s18
    %s21 = sphi 0, %s19
    %s33 = sphi 0, %s35
    %s36 = sphi 0, %s33
    %s37 = sphi 0, %s36
    %s53 = sphi 0, %s37
    %s57 = sphi 0, %s57
    %s59 = sphi 0, %s57
    %s60 = sphi 0, %s59
    %s74 = sphi 0, %s60
    %s78 = sphi 0, %s78
    %s80 = sphi 0, %s78
    %s81 = sphi 0, %s80
    %s95 = sphi 0, %s81
    %s103 = sphi 0, %s105
    %s106 = sphi 0, %s103
    %s107 = sphi 0, %s106
    %s123 = sphi 0, %s107
  $region4: #{conv_block_t_forward.3} parent=0 // loop_header_branch
    %12 = sbr.rel (%p10) target = $region8
  $region5: #{conv_block_t_forward.3} parent=0 // loop_body
    %s14 = ssub.s32 %s9, 1
    %s15 = ssub.s32 %s9, 2
    %s22 = sadd.s32 1, %s17
    %p23 = scmp.ge.s32.totalorder %s22, 1
    %s24 = scalar_select %p23, 0, %s22
    %s25 = sadd.s32 1, %s16
    %s26 = scalar_select %p23, %s25, %s16
    %p27 = scmp.ge.s32.totalorder %s26, 2
    %s28 = scalar_select %p27, 0, %s26
    %s29 = ssub.s32 %s16, %s28
    %s30 = ssub.s32 %s17, %s24
    %s31 = sor.u32 %s29, %s30
    %p32 = scmp.eq.s32.totalorder %s31, 0
    %s34 = sadd.s32 %s33, 1
    %s35 = scalar_select %p32, %s33, %s34
    %p38 = pneg %p32
    %p39 = scmp.eq.s32.totalorder %s9, 1
    %p40 = por %p38, %p39
    %p41 = scmp.ne.s32.totalorder %s33, %s36
    %p42 = scmp.eq.s32.totalorder %s9, 0
    %p43 = por %p41, %p42
    %p44 = scmp.ne.s32.totalorder %s33, %s36
    %p45 = scmp.eq.s32.totalorder %s14, 1
    %p46 = por %p44, %p45
    %p47 = scmp.ne.s32.totalorder %s36, %s37
    %p48 = scmp.eq.s32.totalorder %s14, 0
    %p49 = por %p47, %p48
    %p50 = scmp.ne.s32.totalorder %s36, %s37
    %p51 = scmp.eq.s32.totalorder %s15, 1
    %p52 = por %p50, %p51
    %p54 = scmp.ne.s32.totalorder %s37, %s53
    %p55 = scmp.eq.s32.totalorder %s15, 0
    %p56 = por %p54, %p55
    %s58 = sadd.s32 %s57, 1
    %p61 = scmp.eq.s32.totalorder %s9, 1
    %p62 = scmp.ne.s32.totalorder %s57, %s59
    %p63 = scmp.eq.s32.totalorder %s9, 0
    %p64 = por %p62, %p63
    %p65 = scmp.ne.s32.totalorder %s57, %s59
    %p66 = scmp.eq.s32.totalorder %s14, 1
    %p67 = por %p65, %p66
    %p68 = scmp.ne.s32.totalorder %s59, %s60
    %p69 = scmp.eq.s32.totalorder %s14, 0
    %p70 = por %p68, %p69
    %p71 = scmp.ne.s32.totalorder %s59, %s60
    %p72 = scmp.eq.s32.totalorder %s15, 1
    %p73 = por %p71, %p72
    %p75 = scmp.ne.s32.totalorder %s60, %s74
    %p76 = scmp.eq.s32.totalorder %s15, 0
    %p77 = por %p75, %p76
    %s79 = sadd.s32 %s78, 1
    %p82 = scmp.eq.s32.totalorder %s9, 1
    %p83 = scmp.ne.s32.totalorder %s78, %s80
    %p84 = scmp.eq.s32.totalorder %s9, 0
    %p85 = por %p83, %p84
    %p86 = scmp.ne.s32.totalorder %s78, %s80
    %p87 = scmp.eq.s32.totalorder %s14, 1
    %p88 = por %p86, %p87
    %p89 = scmp.ne.s32.totalorder %s80, %s81
    %p90 = scmp.eq.s32.totalorder %s14, 0
    %p91 = por %p89, %p90
    %p92 = scmp.ne.s32.totalorder %s80, %s81
    %p93 = scmp.eq.s32.totalorder %s15, 1
    %p94 = por %p92, %p93
    %p96 = scmp.ne.s32.totalorder %s81, %s95
    %p97 = scmp.eq.s32.totalorder %s15, 0
    %p98 = por %p96, %p97
    %s99 = ssub.s32 %s16, %s28
    %s100 = ssub.s32 %s17, %s24
    %s101 = sor.u32 %s99, %s100
    %p102 = scmp.eq.s32.totalorder %s101, 0
    %s104 = sadd.s32 %s103, 1
    %s105 = scalar_select %p102, %s103, %s104
    %p108 = pneg %p102
    %p109 = scmp.eq.s32.totalorder %s9, 1
    %p110 = por %p108, %p109
    %p111 = scmp.ne.s32.totalorder %s103, %s106
    %p112 = scmp.eq.s32.totalorder %s9, 0
    %p113 = por %p111, %p112
    %p114 = scmp.ne.s32.totalorder %s103, %s106
    %p115 = scmp.eq.s32.totalorder %s14, 1
    %p116 = por %p114, %p115
    %p117 = scmp.ne.s32.totalorder %s106, %s107
    %p118 = scmp.eq.s32.totalorder %s14, 0
    %p119 = por %p117, %p118
    %p120 = scmp.ne.s32.totalorder %s106, %s107
    %p121 = scmp.eq.s32.totalorder %s15, 1
    %p122 = por %p120, %p121
    %p124 = scmp.ne.s32.totalorder %s107, %s123
    %p125 = scmp.eq.s32.totalorder %s15, 0
    %p126 = por %p124, %p125
    %p127 = scmp.le.s32.totalorder 1, %s9
    %p128 = scmp.lt.s32.totalorder %s9, 3
    %p129 = pnand %p127, %p128
    %p130 = pneg %p129
    // Predicated region
    $region9: #{conv_block_t_forward.3} parent=5 // pred_check
      _
    $region10: #{conv_block_t_forward.3} parent=5 // pred_check_branch
      %132 = sbr.rel (%p129) target = $region12
    $region11: #{conv_block_t_forward.3} parent=5 // pred_region
      %s133 = ssub.s32 %s9, 1
      // Predicated region
      $region13: #{conv_block_t_forward.3} parent=11 // pred_check
        %p134 = pneg %p70
      $region14: #{conv_block_t_forward.3} parent=11 // pred_check_branch
        %136 = sbr.rel (%p134) target = $region16
      $region15: #{conv_block_t_forward.3} parent=11 // pred_region
        _
      $region16: #{conv_block_t_forward.3} parent=11 // pred_fallthru
        _
      // Predicated region
      $region17: #{conv_block_t_forward.3} parent=11 // pred_check
        %p137 = pneg %p91
      $region18: #{conv_block_t_forward.3} parent=11 // pred_check_branch
        %139 = sbr.rel (%p137) target = $region20
      $region19: #{conv_block_t_forward.3} parent=11 // pred_region
        _
      $region20: #{conv_block_t_forward.3} parent=11 // pred_fallthru
        _
    $region12: #{conv_block_t_forward.3} parent=5 // pred_fallthru
      _
    %p140 = scmp.lt.s32.totalorder %s9, 2
    // Predicated region
    $region21: #{conv_block_t_forward.3} parent=5 // pred_check
      %p141 = pneg %p140
    $region22: #{conv_block_t_forward.3} parent=5 // pred_check_branch
      %143 = sbr.rel (%p141) target = $region24
    $region23: #{conv_block_t_forward.3} parent=5 // pred_region
      // Predicated region
      $region25: #{conv_block_t_forward.3} parent=23 // pred_check
        %p144 = pneg %p43
      $region26: #{conv_block_t_forward.3} parent=23 // pred_check_branch
        %146 = sbr.rel (%p144) target = $region28
      $region27: #{conv_block_t_forward.3} parent=23 // pred_region
        %s147 = smul.u32 8, %s17
        %p148 = scmp.lt.s32.totalorder %s16, 1
        %s149 = scalar_select %p148, %s16, 1
        %p150 = scmp.lt.s32.totalorder %s147, 7
        %s151 = scalar_select %p150, %s147, 7
        %s152 = smul.addr %s149, 8
        %s153 = sadd.s32 %s151, %s152
        %s154 = smul.addr %s153, 4
        %s155 = scalar_lea.vmem %s0, %s154
        %s156 = smul.u32 8, %s17
      $region28: #{conv_block_t_forward.3} parent=23 // pred_fallthru
        _
    $region24: #{conv_block_t_forward.3} parent=5 // pred_fallthru
      _
    %p157 = scmp.le.s32.totalorder 1, %s9
    %p158 = scmp.lt.s32.totalorder %s9, 3
    %p159 = pnand %p157, %p158
    %p160 = pneg %p159
    // Predicated region
    $region29: #{conv_block_t_forward.3} parent=5 // pred_check
      _
    $region30: #{conv_block_t_forward.3} parent=5 // pred_check_branch
      %162 = sbr.rel (%p159) target = $region32
    $region31: #{conv_block_t_forward.3} parent=5 // pred_region
      %s163 = ssub.s32 %s9, 1
      %s164 = smul.u32 8, %s19
      %p165 = scmp.lt.s32.totalorder %s18, 1
      %s166 = scalar_select %p165, %s18, 1
      %p167 = scmp.lt.s32.totalorder %s164, 7
      %s168 = scalar_select %p167, %s164, 7
      %s169 = smul.addr %s166, 8
      %s170 = sadd.s32 %s168, %s169
      %s171 = smul.addr %s170, 4
      %s172 = scalar_lea.vmem %s0, %s171
      %p173 = pneg %p49
      %p174 = pneg %p46
      %p175 = pneg %p70
      %p176 = pneg %p67
      %p177 = pneg %p91
      %p178 = pneg %p88
      %p179 = pneg %p119
      %p180 = pneg %p116
      %s181 = smul.u32 8, %s19
      %p182 = scmp.lt.s32.totalorder %s18, 1
      %s183 = scalar_select %p182, %s18, 1
      %p184 = scmp.lt.s32.totalorder %s181, 7
      %s185 = scalar_select %p184, %s181, 7
      %s186 = smul.addr %s183, 8
      %s187 = sadd.s32 %s185, %s186
      %s188 = smul.addr %s187, 8
      %s189 = scalar_lea.vmem %s3, %s188
      %s190 = smul.u32 8, %s19
      %p191 = scmp.lt.s32.totalorder %s18, 1
      %s192 = scalar_select %p191, %s18, 1
      %p193 = scmp.lt.s32.totalorder %s190, 7
      %s194 = scalar_select %p193, %s190, 7
      %s195 = smul.addr %s192, 8
      %s196 = sadd.s32 %s194, %s195
      %s197 = smul.addr %s196, 4
      %s198 = scalar_lea.vmem %s0, %s197
      %s199 = smul.u32 8, %s19
      %s200 = smul.u32 8, %s19
      %p201 = scmp.lt.s32.totalorder %s18, 1
      %s202 = scalar_select %p201, %s18, 1
      %p203 = scmp.lt.s32.totalorder %s200, 7
      %s204 = scalar_select %p203, %s200, 7
      %s205 = smul.addr %s202, 8
      %s206 = sadd.s32 %s204, %s205
      %s207 = smul.addr %s206, 8
      %s208 = scalar_lea.vmem %s3, %s207
      %s209 = smul.u32 8, %s19
      %v210 = vld [vmem:[%s198] sm:$0xff]
      %v211 = vld [vmem:[%s198 + $0x8] sm:$0xff]
      %v212 = vld [vmem:[%s198 + $0x10] sm:$0xff]
      %v213 = vld [vmem:[%s198 + $0x18] sm:$0xff]
      %v214 = vunpack.c.l.bf16 %v210
      %v215 = vunpack.c.h.bf16 %v210
      %v216 = vunpack.c.l.bf16 %v211
      %v217 = vunpack.c.h.bf16 %v211
      %v218 = vunpack.c.l.bf16 %v212
      %v219 = vunpack.c.h.bf16 %v212
      %v220 = vunpack.c.l.bf16 %v213
      %v221 = vunpack.c.h.bf16 %v213
      %v222 = vld [vmem:[%s1] sm:$0xff]
      %224 = vset.pattern.permute.xlu0 0
      %225 = vperm.xlu0 %224, %v222
      %v226 = vpop.permute.xlu0 %225
      %v228 = vmul.f32 %v214, %v226
      %v229 = vmul.f32 %v215, %v226
      %v230 = vmul.f32 %v216, %v226
      %v231 = vmul.f32 %v217, %v226
      %v232 = vmul.f32 %v218, %v226
      %v233 = vmul.f32 %v219, %v226
      %v234 = vmul.f32 %v220, %v226
      %v235 = vmul.f32 %v221, %v226
      %v236 = vld [vmem:[%s2] sm:$0xff]
      %238 = vset.pattern.permute.xlu0 0
      %239 = vperm.xlu0 %238, %v236
      %v240 = vpop.permute.xlu0 %239
      %v242 = vadd.f32 %v228, %v240
      %v243 = vadd.f32 %v229, %v240
      %v244 = vadd.f32 %v230, %v240
      %v245 = vadd.f32 %v231, %v240
      %v246 = vadd.f32 %v232, %v240
      %v247 = vadd.f32 %v233, %v240
      %v248 = vadd.f32 %v234, %v240
      %v249 = vadd.f32 %v235, %v240
      %v250 = vsub.f32 0.0, %v242
      %v251 = vsub.f32 0.0, %v243
      %v252 = vsub.f32 0.0, %v244
      %v253 = vsub.f32 0.0, %v245
      %v254 = vsub.f32 0.0, %v246
      %v255 = vsub.f32 0.0, %v247
      %v256 = vsub.f32 0.0, %v248
      %v257 = vsub.f32 0.0, %v249
      %v258 = vmul.f32 %v250, 1.442695
      %v259 = vpow.pop %v258
      %v260 = vmul.f32 %v251, 1.442695
      %v261 = vpow.pop %v260
      %v262 = vmul.f32 %v252, 1.442695
      %v263 = vpow.pop %v262
      %v264 = vmul.f32 %v253, 1.442695
      %v265 = vpow.pop %v264
      %v266 = vmul.f32 %v254, 1.442695
      %v267 = vpow.pop %v266
      %v268 = vmul.f32 %v255, 1.442695
      %v269 = vpow.pop %v268
      %v270 = vmul.f32 %v256, 1.442695
      %v271 = vpow.pop %v270
      %v272 = vmul.f32 %v257, 1.442695
      %v273 = vpow.pop %v272
      %v274 = vadd.f32 %v259, 1.0
      %v275 = vadd.f32 %v261, 1.0
      %v276 = vadd.f32 %v263, 1.0
      %v277 = vadd.f32 %v265, 1.0
      %v278 = vadd.f32 %v267, 1.0
      %v279 = vadd.f32 %v269, 1.0
      %v280 = vadd.f32 %v271, 1.0
      %v281 = vadd.f32 %v273, 1.0
      %v282 = vrcp.pop %v274
      %v283 = vrcp.pop %v275
      %v284 = vrcp.pop %v276
      %v285 = vrcp.pop %v277
      %v286 = vrcp.pop %v278
      %v287 = vrcp.pop %v279
      %v288 = vrcp.pop %v280
      %v289 = vrcp.pop %v281
      %v290 = vmul.f32 %v242, %v282
      %v291 = vmul.f32 %v243, %v283
      %v292 = vmul.f32 %v244, %v284
      %v293 = vmul.f32 %v245, %v285
      %v294 = vmul.f32 %v246, %v286
      %v295 = vmul.f32 %v247, %v287
      %v296 = vmul.f32 %v248, %v288
      %v297 = vmul.f32 %v249, %v289
      %298 = vst [vmem:[%s208] sm:$0xff] %v290
      %299 = vst [vmem:[%s208 + $0x8] sm:$0xff] %v291
      %300 = vst [vmem:[%s208 + $0x10] sm:$0xff] %v292
      %301 = vst [vmem:[%s208 + $0x18] sm:$0xff] %v293
      %302 = vst [vmem:[%s208 + $0x20] sm:$0xff] %v294
      %303 = vst [vmem:[%s208 + $0x28] sm:$0xff] %v295
      %304 = vst [vmem:[%s208 + $0x30] sm:$0xff] %v296
      %305 = vst [vmem:[%s208 + $0x38] sm:$0xff] %v297
      %s306 = smul.u32 8, %s19
      %p307 = scmp.lt.s32.totalorder %s18, 1
      %s308 = scalar_select %p307, %s18, 1
      %p309 = scmp.lt.s32.totalorder %s306, 7
      %s310 = scalar_select %p309, %s306, 7
      %s311 = smul.addr %s308, 8
      %s312 = sadd.s32 %s310, %s311
      %s313 = smul.addr %s312, 8
      %s314 = scalar_lea.vmem %s3, %s313
      // Predicated region
      $region33: #{conv_block_t_forward.3} parent=31 // pred_check
        %p315 = pneg %p116
      $region34: #{conv_block_t_forward.3} parent=31 // pred_check_branch
        %317 = sbr.rel (%p315) target = $region36
      $region35: #{conv_block_t_forward.3} parent=31 // pred_region
        %s318 = smul.u32 8, %s19
      $region36: #{conv_block_t_forward.3} parent=31 // pred_fallthru
        _
    $region32: #{conv_block_t_forward.3} parent=5 // pred_fallthru
      _
    %p319 = scmp.le.s32.totalorder 2, %s9
    // Predicated region
    $region37: #{conv_block_t_forward.3} parent=5 // pred_check
      %p320 = pneg %p319
    $region38: #{conv_block_t_forward.3} parent=5 // pred_check_branch
      %322 = sbr.rel (%p320) target = $region40
    $region39: #{conv_block_t_forward.3} parent=5 // pred_region
      %s323 = ssub.s32 %s9, 2
      // Predicated region
      $region41: #{conv_block_t_forward.3} parent=39 // pred_check
        %p324 = pneg %p122
      $region42: #{conv_block_t_forward.3} parent=39 // pred_check_branch
        %326 = sbr.rel (%p324) target = $region44
      $region43: #{conv_block_t_forward.3} parent=39 // pred_region
        %s327 = smul.u32 8, %s21
        %p328 = scmp.lt.s32.totalorder %s20, 1
        %s329 = scalar_select %p328, %s20, 1
        %p330 = scmp.lt.s32.totalorder %s327, 7
        %s331 = scalar_select %p330, %s327, 7
        %s332 = smul.addr %s329, 8
        %s333 = sadd.s32 %s331, %s332
        %s334 = smul.addr %s333, 8
        %s335 = scalar_lea.vmem %s3, %s334
      $region44: #{conv_block_t_forward.3} parent=39 // pred_fallthru
        _
    $region40: #{conv_block_t_forward.3} parent=5 // pred_fallthru
      _
  $region6: #{conv_block_t_forward.3} parent=0 // loop_footer
    %s13 = sadd.s32 1, %s9
  $region7: #{conv_block_t_forward.3} parent=0 // loop_footer_branch
    %8 = sbr.rel target = $region3
  $region8: #{conv_block_t_forward.3} parent=0 // loop_exit
    _

// kernel: conv_block_t_forward.2
$region0: #{conv_block_t_forward.2}
  #allocation0 [shape = 'u32[]', space=smem, size = 0x4, offset = 0x4, fixed_abs, tag = 'smem constant byte address 0x4 - core index']
  #allocation1 [shape = 'u32[144,128]{1,0:T(1,128)}', space=vmem, size = 0x12000, scoped, tag = 'internal scratch']
  %s0 = inlined_call_operand.vmem [shape: bf16[8,48], index: 0, kind: input, shape index: {}]
  %s1 = inlined_call_operand.vmem [shape: bf16[2,48,1024], index: 1, kind: input, shape index: {}]
  %s2 = inlined_call_operand.vmem [shape: bf16[2,8,1024], index: 2, kind: output, shape index: {0}]
  %s3 = inlined_call_operand.vmem [shape: f32[2,8,1], index: 3, kind: output, shape index: {1}]
  %s4 = inlined_call_operand.vmem [shape: f32[2,8,1], index: 4, kind: output, shape index: {2}]
  %5 = xla_tuple %s2, %s3, %s4
  %s6 = sld [smem:[#allocation0]]
  $region61: #{conv_block_t_forward.2} parent=0
    _
  %s8 = ssub.s32 1, %s6
  %s9 = scalar_select 0, %s8, %s6
  loop: start=0, step=1, limit=4
  $region2: #{conv_block_t_forward.2} parent=0 // loop_pre_header
    _
  $region3: #{conv_block_t_forward.2} parent=0 // loop_header
    %s11 = sphi 0, %s15
    %p12 = scmp.ge.s32.totalorder %s11, 4
    %s18 = sphi 0, %s30
    %s19 = sphi 0, %s26
    %s20 = sphi 0, %s18
    %s21 = sphi 0, %s19
    %s22 = sphi 0, %s20
    %s23 = sphi 0, %s21
    %s31 = sphi 0, %s31
    %s33 = sphi 0, %s31
    %s34 = sphi 0, %s33
    %s48 = sphi 0, %s34
    %s56 = sphi 0, %s58
    %s59 = sphi 0, %s56
    %s60 = sphi 0, %s59
    %s76 = sphi 0, %s60
    %s84 = sphi 0, %s86
    %s87 = sphi 0, %s84
    %s88 = sphi 0, %s87
    %s104 = sphi 0, %s88
    %s110 = sphi 0, %s112
    %s113 = sphi 0, %s110
    %s114 = sphi 0, %s113
    %s130 = sphi 0, %s114
    %s136 = sphi 0, %s138
    %s139 = sphi 0, %s136
    %s140 = sphi 0, %s139
    %s156 = sphi 0, %s140
  $region4: #{conv_block_t_forward.2} parent=0 // loop_header_branch
    %14 = sbr.rel (%p12) target = $region8
  $region5: #{conv_block_t_forward.2} parent=0 // loop_body
    %s16 = ssub.s32 %s11, 1
    %s17 = ssub.s32 %s11, 2
    %s24 = sadd.s32 1, %s19
    %p25 = scmp.ge.s32.totalorder %s24, 1
    %s26 = scalar_select %p25, 0, %s24
    %s27 = sadd.s32 1, %s18
    %s28 = scalar_select %p25, %s27, %s18
    %p29 = scmp.ge.s32.totalorder %s28, 2
    %s30 = scalar_select %p29, 0, %s28
    %s32 = sadd.s32 %s31, 1
    %p35 = scmp.eq.s32.totalorder %s11, 1
    %p36 = scmp.ne.s32.totalorder %s31, %s33
    %p37 = scmp.eq.s32.totalorder %s11, 0
    %p38 = por %p36, %p37
    %p39 = scmp.ne.s32.totalorder %s31, %s33
    %p40 = scmp.eq.s32.totalorder %s16, 1
    %p41 = por %p39, %p40
    %p42 = scmp.ne.s32.totalorder %s33, %s34
    %p43 = scmp.eq.s32.totalorder %s16, 0
    %p44 = por %p42, %p43
    %p45 = scmp.ne.s32.totalorder %s33, %s34
    %p46 = scmp.eq.s32.totalorder %s17, 1
    %p47 = por %p45, %p46
    %p49 = scmp.ne.s32.totalorder %s34, %s48
    %p50 = scmp.eq.s32.totalorder %s17, 0
    %p51 = por %p49, %p50
    %s52 = ssub.s32 %s18, %s30
    %s53 = ssub.s32 %s19, %s26
    %s54 = sor.u32 %s52, %s53
    %p55 = scmp.eq.s32.totalorder %s54, 0
    %s57 = sadd.s32 %s56, 1
    %s58 = scalar_select %p55, %s56, %s57
    %p61 = pneg %p55
    %p62 = scmp.eq.s32.totalorder %s11, 1
    %p63 = por %p61, %p62
    %p64 = scmp.ne.s32.totalorder %s56, %s59
    %p65 = scmp.eq.s32.totalorder %s11, 0
    %p66 = por %p64, %p65
    %p67 = scmp.ne.s32.totalorder %s56, %s59
    %p68 = scmp.eq.s32.totalorder %s16, 1
    %p69 = por %p67, %p68
    %p70 = scmp.ne.s32.totalorder %s59, %s60
    %p71 = scmp.eq.s32.totalorder %s16, 0
    %p72 = por %p70, %p71
    %p73 = scmp.ne.s32.totalorder %s59, %s60
    %p74 = scmp.eq.s32.totalorder %s17, 1
    %p75 = por %p73, %p74
    %p77 = scmp.ne.s32.totalorder %s60, %s76
    %p78 = scmp.eq.s32.totalorder %s17, 0
    %p79 = por %p77, %p78
    %s80 = ssub.s32 %s18, %s30
    %s81 = ssub.s32 %s19, %s26
    %s82 = sor.u32 %s80, %s81
    %p83 = scmp.eq.s32.totalorder %s82, 0
    %s85 = sadd.s32 %s84, 1
    %s86 = scalar_select %p83, %s84, %s85
    %p89 = pneg %p83
    %p90 = scmp.eq.s32.totalorder %s11, 1
    %p91 = por %p89, %p90
    %p92 = scmp.ne.s32.totalorder %s84, %s87
    %p93 = scmp.eq.s32.totalorder %s11, 0
    %p94 = por %p92, %p93
    %p95 = scmp.ne.s32.totalorder %s84, %s87
    %p96 = scmp.eq.s32.totalorder %s16, 1
    %p97 = por %p95, %p96
    %p98 = scmp.ne.s32.totalorder %s87, %s88
    %p99 = scmp.eq.s32.totalorder %s16, 0
    %p100 = por %p98, %p99
    %p101 = scmp.ne.s32.totalorder %s87, %s88
    %p102 = scmp.eq.s32.totalorder %s17, 1
    %p103 = por %p101, %p102
    %p105 = scmp.ne.s32.totalorder %s88, %s104
    %p106 = scmp.eq.s32.totalorder %s17, 0
    %p107 = por %p105, %p106
    %s108 = ssub.s32 %s18, %s30
    %p109 = scmp.eq.s32.totalorder %s108, 0
    %s111 = sadd.s32 %s110, 1
    %s112 = scalar_select %p109, %s110, %s111
    %p115 = pneg %p109
    %p116 = scmp.eq.s32.totalorder %s11, 1
    %p117 = por %p115, %p116
    %p118 = scmp.ne.s32.totalorder %s110, %s113
    %p119 = scmp.eq.s32.totalorder %s11, 0
    %p120 = por %p118, %p119
    %p121 = scmp.ne.s32.totalorder %s110, %s113
    %p122 = scmp.eq.s32.totalorder %s16, 1
    %p123 = por %p121, %p122
    %p124 = scmp.ne.s32.totalorder %s113, %s114
    %p125 = scmp.eq.s32.totalorder %s16, 0
    %p126 = por %p124, %p125
    %p127 = scmp.ne.s32.totalorder %s113, %s114
    %p128 = scmp.eq.s32.totalorder %s17, 1
    %p129 = por %p127, %p128
    %p131 = scmp.ne.s32.totalorder %s114, %s130
    %p132 = scmp.eq.s32.totalorder %s17, 0
    %p133 = por %p131, %p132
    %s134 = ssub.s32 %s18, %s30
    %p135 = scmp.eq.s32.totalorder %s134, 0
    %s137 = sadd.s32 %s136, 1
    %s138 = scalar_select %p135, %s136, %s137
    %p141 = pneg %p135
    %p142 = scmp.eq.s32.totalorder %s11, 1
    %p143 = por %p141, %p142
    %p144 = scmp.ne.s32.totalorder %s136, %s139
    %p145 = scmp.eq.s32.totalorder %s11, 0
    %p146 = por %p144, %p145
    %p147 = scmp.ne.s32.totalorder %s136, %s139
    %p148 = scmp.eq.s32.totalorder %s16, 1
    %p149 = por %p147, %p148
    %p150 = scmp.ne.s32.totalorder %s139, %s140
    %p151 = scmp.eq.s32.totalorder %s16, 0
    %p152 = por %p150, %p151
    %p153 = scmp.ne.s32.totalorder %s139, %s140
    %p154 = scmp.eq.s32.totalorder %s17, 1
    %p155 = por %p153, %p154
    %p157 = scmp.ne.s32.totalorder %s140, %s156
    %p158 = scmp.eq.s32.totalorder %s17, 0
    %p159 = por %p157, %p158
    %p160 = scmp.le.s32.totalorder 1, %s11
    %p161 = scmp.lt.s32.totalorder %s11, 3
    %p162 = pnand %p160, %p161
    %p163 = pneg %p162
    // Predicated region
    $region9: #{conv_block_t_forward.2} parent=5 // pred_check
      _
    $region10: #{conv_block_t_forward.2} parent=5 // pred_check_branch
      %165 = sbr.rel (%p162) target = $region12
    $region11: #{conv_block_t_forward.2} parent=5 // pred_region
      %s166 = ssub.s32 %s11, 1
      // Predicated region
      $region13: #{conv_block_t_forward.2} parent=11 // pred_check
        %p167 = pneg %p44
      $region14: #{conv_block_t_forward.2} parent=11 // pred_check_branch
        %169 = sbr.rel (%p167) target = $region16
      $region15: #{conv_block_t_forward.2} parent=11 // pred_region
        _
      $region16: #{conv_block_t_forward.2} parent=11 // pred_fallthru
        _
    $region12: #{conv_block_t_forward.2} parent=5 // pred_fallthru
      _
    %p170 = scmp.lt.s32.totalorder %s11, 2
    // Predicated region
    $region17: #{conv_block_t_forward.2} parent=5 // pred_check
      %p171 = pneg %p170
    $region18: #{conv_block_t_forward.2} parent=5 // pred_check_branch
      %173 = sbr.rel (%p171) target = $region20
    $region19: #{conv_block_t_forward.2} parent=5 // pred_region
      // Predicated region
      $region21: #{conv_block_t_forward.2} parent=19 // pred_check
        %p174 = pneg %p66
      $region22: #{conv_block_t_forward.2} parent=19 // pred_check_branch
        %176 = sbr.rel (%p174) target = $region24
      $region23: #{conv_block_t_forward.2} parent=19 // pred_region
        %s177 = smul.u32 8, %s19
        %p178 = scmp.lt.s32.totalorder %s18, 1
        %s179 = scalar_select %p178, %s18, 1
        %p180 = scmp.lt.s32.totalorder %s177, 7
        %s181 = scalar_select %p180, %s177, 7
        %s182 = smul.addr %s179, 48
        %s183 = sadd.s32 %s181, %s182
        %s184 = smul.addr %s183, 4
        %s185 = scalar_lea.vmem %s1, %s184
        %s186 = smul.u32 8, %s19
      $region24: #{conv_block_t_forward.2} parent=19 // pred_fallthru
        _
    $region20: #{conv_block_t_forward.2} parent=5 // pred_fallthru
      _
    %p187 = scmp.le.s32.totalorder 1, %s11
    %p188 = scmp.lt.s32.totalorder %s11, 3
    %p189 = pnand %p187, %p188
    %p190 = pneg %p189
    // Predicated region
    $region25: #{conv_block_t_forward.2} parent=5 // pred_check
      _
    $region26: #{conv_block_t_forward.2} parent=5 // pred_check_branch
      %192 = sbr.rel (%p189) target = $region28
    $region27: #{conv_block_t_forward.2} parent=5 // pred_region
      %s193 = ssub.s32 %s11, 1
      %p194 = pneg %p44
      %p195 = pneg %p41
      %s196 = smul.u32 8, %s21
      %p197 = scmp.lt.s32.totalorder %s20, 1
      %s198 = scalar_select %p197, %s20, 1
      %p199 = scmp.lt.s32.totalorder %s196, 7
      %s200 = scalar_select %p199, %s196, 7
      %s201 = smul.addr %s198, 48
      %s202 = sadd.s32 %s200, %s201
      %s203 = smul.addr %s202, 4
      %s204 = scalar_lea.vmem %s1, %s203
      %p205 = pneg %p72
      %p206 = pneg %p69
      %p207 = pneg %p100
      %p208 = pneg %p97
      %s209 = smul.u32 8, %s21
      %p210 = scmp.lt.s32.totalorder %s20, 1
      %s211 = scalar_select %p210, %s20, 1
      %p212 = scmp.lt.s32.totalorder %s209, 7
      %s213 = scalar_select %p212, %s209, 7
      %s214 = smul.addr %s211, 8
      %s215 = sadd.s32 %s213, %s214
      %s216 = smul.addr %s215, 4
      %s217 = scalar_lea.vmem %s2, %s216
      %p218 = pneg %p126
      %p219 = pneg %p123
      %p220 = scmp.lt.s32.totalorder %s20, 1
      %s221 = scalar_select %p220, %s20, 1
      %s222 = smul.addr %s221, 8
      %s223 = scalar_lea.vmem %s3, %s222
      %p224 = pneg %p152
      %p225 = pneg %p149
      %p226 = scmp.lt.s32.totalorder %s20, 1
      %s227 = scalar_select %p226, %s20, 1
      %s228 = smul.addr %s227, 8
      %s229 = scalar_lea.vmem %s4, %s228
      %s230 = smul.u32 8, %s21
      %p231 = scmp.lt.s32.totalorder %s20, 1
      %s232 = scalar_select %p231, %s20, 1
      %p233 = scmp.lt.s32.totalorder %s230, 7
      %s234 = scalar_select %p233, %s230, 7
      %s235 = smul.addr %s232, 48
      %s236 = sadd.s32 %s234, %s235
      %s237 = smul.addr %s236, 4
      %s238 = scalar_lea.vmem %s1, %s237
      %s239 = smul.u32 8, %s21
      %s240 = smul.u32 8, %s21
      %p241 = scmp.lt.s32.totalorder %s20, 1
      %s242 = scalar_select %p241, %s20, 1
      %p243 = scmp.lt.s32.totalorder %s240, 7
      %s244 = scalar_select %p243, %s240, 7
      %s245 = smul.addr %s242, 8
      %s246 = sadd.s32 %s244, %s245
      %s247 = smul.addr %s246, 4
      %s248 = scalar_lea.vmem %s2, %s247
      %s249 = smul.u32 8, %s21
      %p250 = scmp.lt.s32.totalorder %s20, 1
      %s251 = scalar_select %p250, %s20, 1
      %s252 = smul.addr %s251, 8
      %s253 = scalar_lea.vmem %s3, %s252
      %p254 = scmp.lt.s32.totalorder %s20, 1
      %s255 = scalar_select %p254, %s20, 1
      %s256 = smul.addr %s255, 8
      %s257 = scalar_lea.vmem %s4, %s256
      %p259 = scmp.eq.s32.totalorder %s21, 0
      // Predicated region
      $region29: #{conv_block_t_forward.2} parent=27 // pred_check
        %p260 = pneg %p259
      $region30: #{conv_block_t_forward.2} parent=27 // pred_check_branch
        %262 = sbr.rel (%p260) target = $region32
      $region31: #{conv_block_t_forward.2} parent=27 // pred_region
        %vm263 = vcmask 7168
        %264 = vst.msk [vmem:[%s253] sm:$0xff] %vm263, 0.0
        %265 = vst.msk [vmem:[%s257] sm:$0xff] %vm263, 0.0
      $region32: #{conv_block_t_forward.2} parent=27 // pred_fallthru
        _
      %v266 = vld [vmem:[%s0] sm:$0xf]
      %v267 = vld [vmem:[%s238] sm:$0xff]
      %v268 = vld [vmem:[%s238 + $0x8] sm:$0xff]
      %v269 = vld [vmem:[%s238 + $0x10] sm:$0xff]
      %v270 = vld [vmem:[%s238 + $0x18] sm:$0xff]
      %v271 = vld [vmem:[%s238 + $0x20] sm:$0xff]
      %v272 = vld [vmem:[%s238 + $0x28] sm:$0xff]
      %v273 = vld [vmem:[%s238 + $0x30] sm:$0xff]
      %v274 = vld [vmem:[%s238 + $0x38] sm:$0xff]
      %v275 = vld [vmem:[%s238 + $0x40] sm:$0xff]
      %v276 = vld [vmem:[%s238 + $0x48] sm:$0xff]
      %v277 = vld [vmem:[%s238 + $0x50] sm:$0xff]
      %v278 = vld [vmem:[%s238 + $0x58] sm:$0xff]
      %v279 = vld [vmem:[%s238 + $0x60] sm:$0xff]
      %v280 = vld [vmem:[%s238 + $0x68] sm:$0xff]
      %v281 = vld [vmem:[%s238 + $0x70] sm:$0xff]
      %v282 = vld [vmem:[%s238 + $0x78] sm:$0xff]
      %v283 = vld [vmem:[%s238 + $0x80] sm:$0xff]
      %v284 = vld [vmem:[%s238 + $0x88] sm:$0xff]
      %v285 = vld [vmem:[%s238 + $0x90] sm:$0xff]
      %v286 = vld [vmem:[%s238 + $0x98] sm:$0xff]
      %v287 = vld [vmem:[%s238 + $0xa0] sm:$0xff]
      %v288 = vld [vmem:[%s238 + $0xa8] sm:$0xff]
      %v289 = vld [vmem:[%s238 + $0xb0] sm:$0xff]
      %v290 = vld [vmem:[%s238 + $0xb8] sm:$0xff]
      %v315 = vunpack.c.l.b16 %v267
      %v316 = vunpack.c.h.b16 %v267
      %v317 = vunpack.c.l.b16 %v268
      %v318 = vunpack.c.h.b16 %v268
      %v319 = vunpack.c.l.b16 %v269
      %v320 = vunpack.c.h.b16 %v269
      %v321 = vunpack.c.l.b16 %v270
      %v322 = vunpack.c.h.b16 %v270
      %v323 = vunpack.c.l.b16 %v271
      %v324 = vunpack.c.h.b16 %v271
      %v325 = vunpack.c.l.b16 %v272
      %v326 = vunpack.c.h.b16 %v272
      %v327 = vunpack.c.l.b16 %v273
      %v328 = vunpack.c.h.b16 %v273
      %v329 = vunpack.c.l.b16 %v274
      %v330 = vunpack.c.h.b16 %v274
      %v331 = vunpack.c.l.b16 %v275
      %v332 = vunpack.c.h.b16 %v275
      %v333 = vunpack.c.l.b16 %v276
      %v334 = vunpack.c.h.b16 %v276
      %v335 = vunpack.c.l.b16 %v277
      %v336 = vunpack.c.h.b16 %v277
      %v337 = vunpack.c.l.b16 %v278
      %v338 = vunpack.c.h.b16 %v278
      %v339 = vunpack.c.l.b16 %v279
      %v340 = vunpack.c.h.b16 %v279
      %v341 = vunpack.c.l.b16 %v280
      %v342 = vunpack.c.h.b16 %v280
      %v343 = vunpack.c.l.b16 %v281
      %v344 = vunpack.c.h.b16 %v281
      %v345 = vunpack.c.l.b16 %v282
      %v346 = vunpack.c.h.b16 %v282
      %v347 = vunpack.c.l.b16 %v283
      %v348 = vunpack.c.h.b16 %v283
      %v349 = vunpack.c.l.b16 %v284
      %v350 = vunpack.c.h.b16 %v284
      %v351 = vunpack.c.l.b16 %v285
      %v352 = vunpack.c.h.b16 %v285
      %v353 = vunpack.c.l.b16 %v286
      %v354 = vunpack.c.h.b16 %v286
      %v355 = vunpack.c.l.b16 %v287
      %v356 = vunpack.c.h.b16 %v287
      %v357 = vunpack.c.l.b16 %v288
      %v358 = vunpack.c.h.b16 %v288
      %v359 = vunpack.c.l.b16 %v289
      %v360 = vunpack.c.h.b16 %v289
      %v361 = vunpack.c.l.b16 %v290
      %v362 = vunpack.c.h.b16 %v290
      %v363 = vpack.c.b16 %v323, %v315
      %v364 = vpack.c.b16 %v324, %v316
      %v365 = vpack.c.b16 %v325, %v317
      %v366 = vpack.c.b16 %v326, %v318
      %v367 = vpack.c.b16 %v327, %v319
      %v368 = vpack.c.b16 %v328, %v320
      %v369 = vpack.c.b16 %v329, %v321
      %v370 = vpack.c.b16 %v330, %v322
      %v371 = vpack.c.b16 %v339, %v331
      %v372 = vpack.c.b16 %v340, %v332
      %v373 = vpack.c.b16 %v341, %v333
      %v374 = vpack.c.b16 %v342, %v334
      %v375 = vpack.c.b16 %v343, %v335
      %v376 = vpack.c.b16 %v344, %v336
      %v377 = vpack.c.b16 %v345, %v337
      %v378 = vpack.c.b16 %v346, %v338
      %v379 = vpack.c.b16 %v355, %v347
      %v380 = vpack.c.b16 %v356, %v348
      %v381 = vpack.c.b16 %v357, %v349
      %v382 = vpack.c.b16 %v358, %v350
      %v383 = vpack.c.b16 %v359, %v351
      %v384 = vpack.c.b16 %v360, %v352
      %v385 = vpack.c.b16 %v361, %v353
      %v386 = vpack.c.b16 %v362, %v354
      %vm411 = vcmask 392192
      %v413 = vsel %vm411, %v266, 0
      %415 = vmatprep.subr.bf16.mxu0 %v364
      %416 = vmatpush1.bf16.msra.mxu0 %v363
      %417 = vmatprep.subr.bf16.mxu0 %v372
      %418 = vmatpush1.bf16.msra.mxu0 %v371
      %419 = vmatprep.subr.bf16.mxu0 %v380
      %420 = vmatpush1.bf16.msra.mxu0 %v379
      %421 = vmatprep.subr.bf16.mxu0 0
      %422 = vmatpush1.bf16.msra.mxu0 0
      %423 = vmatprep.subr.bf16.mxu0 0
      %424 = vmatpush1.bf16.msra.mxu0 0
      %425 = vmatprep.subr.bf16.mxu0 0
      %426 = vmatpush1.bf16.msra.mxu0 0
      %427 = vmatprep.subr.bf16.mxu0 0
      %428 = vmatpush1.bf16.msra.mxu0 0
      %429 = vmatprep.subr.bf16.mxu0 0
      %430 = vmatpush1.bf16.msra.mxu0 0
      %431 = vmatprep.subr.bf16.mxu0 0
      %432 = vmatpush1.bf16.msra.mxu0 0
      %433 = vmatprep.subr.bf16.mxu0 0
      %434 = vmatpush1.bf16.msra.mxu0 0
      %435 = vmatprep.subr.bf16.mxu0 0
      %436 = vmatpush1.bf16.msra.mxu0 0
      %437 = vmatprep.subr.bf16.mxu0 0
      %438 = vmatpush1.bf16.msra.mxu0 0
      %439 = vmatprep.subr.bf16.mxu0 0
      %440 = vmatpush1.bf16.msra.mxu0 0
      %441 = vmatprep.subr.bf16.mxu0 0
      %442 = vmatpush1.bf16.msra.mxu0 0
      %443 = vmatprep.subr.bf16.mxu0 0
      %444 = vmatpush1.bf16.msra.mxu0 0
      %445 = vmatprep.subr.bf16.mxu0 0
      %446 = vmatpush1.bf16.msra.mxu0 0
      %447 = vmatprep.mubr.bf16.mxu0 0
      %448 = vmatmul.mubr.bf16.gmra.mrb[0].mxu0 %v413
      %v449 = vpop.f32.mrb[0].mxu0
      %v450 = vadd.f32 0.0, %v449
      %v451 = vpop.f32.mrb[0].mxu0
      %v452 = vadd.f32 0.0, %v451
      %v453 = vpop.f32.mrb[0].mxu0
      %v454 = vpop.f32.mrb[0].mxu0
      %455 = vdwg.mxu0
      %456 = vmatprep.subr.bf16.mxu0 %v366
      %457 = vmatpush1.bf16.msra.mxu0 %v365
      %458 = vmatprep.subr.bf16.mxu0 %v374
      %459 = vmatpush1.bf16.msra.mxu0 %v373
      %460 = vmatprep.subr.bf16.mxu0 %v382
      %461 = vmatpush1.bf16.msra.mxu0 %v381
      %462 = vmatprep.subr.bf16.mxu0 0
      %463 = vmatpush1.bf16.msra.mxu0 0
      %464 = vmatprep.subr.bf16.mxu0 0
      %465 = vmatpush1.bf16.msra.mxu0 0
      %466 = vmatprep.subr.bf16.mxu0 0
      %467 = vmatpush1.bf16.msra.mxu0 0
      %468 = vmatprep.subr.bf16.mxu0 0
      %469 = vmatpush1.bf16.msra.mxu0 0
      %470 = vmatprep.subr.bf16.mxu0 0
      %471 = vmatpush1.bf16.msra.mxu0 0
      %472 = vmatprep.subr.bf16.mxu0 0
      %473 = vmatpush1.bf16.msra.mxu0 0
      %474 = vmatprep.subr.bf16.mxu0 0
      %475 = vmatpush1.bf16.msra.mxu0 0
      %476 = vmatprep.subr.bf16.mxu0 0
      %477 = vmatpush1.bf16.msra.mxu0 0
      %478 = vmatprep.subr.bf16.mxu0 0
      %479 = vmatpush1.bf16.msra.mxu0 0
      %480 = vmatprep.subr.bf16.mxu0 0
      %481 = vmatpush1.bf16.msra.mxu0 0
      %482 = vmatprep.subr.bf16.mxu0 0
      %483 = vmatpush1.bf16.msra.mxu0 0
      %484 = vmatprep.subr.bf16.mxu0 0
      %485 = vmatpush1.bf16.msra.mxu0 0
      %486 = vmatprep.subr.bf16.mxu0 0
      %487 = vmatpush1.bf16.msra.mxu0 0
      %488 = vmatprep.mubr.bf16.mxu0 0
      %489 = vmatmul.mubr.bf16.gmra.mrb[0].mxu0 %v413
      %v490 = vpop.f32.mrb[0].mxu0
      %v491 = vadd.f32 0.0, %v490
      %v492 = vpop.f32.mrb[0].mxu0
      %v493 = vadd.f32 0.0, %v492
      %v494 = vpop.f32.mrb[0].mxu0
      %v495 = vpop.f32.mrb[0].mxu0
      %496 = vdwg.mxu0
      %497 = vmatprep.subr.bf16.mxu0 %v368
      %498 = vmatpush1.bf16.msra.mxu0 %v367
      %499 = vmatprep.subr.bf16.mxu0 %v376
      %500 = vmatpush1.bf16.msra.mxu0 %v375
      %501 = vmatprep.subr.bf16.mxu0 %v384
      %502 = vmatpush1.bf16.msra.mxu0 %v383
      %503 = vmatprep.subr.bf16.mxu0 0
      %504 = vmatpush1.bf16.msra.mxu0 0
      %505 = vmatprep.subr.bf16.mxu0 0
      %506 = vmatpush1.bf16.msra.mxu0 0
      %507 = vmatprep.subr.bf16.mxu0 0
      %508 = vmatpush1.bf16.msra.mxu0 0
      %509 = vmatprep.subr.bf16.mxu0 0
      %510 = vmatpush1.bf16.msra.mxu0 0
      %511 = vmatprep.subr.bf16.mxu0 0
      %512 = vmatpush1.bf16.msra.mxu0 0
      %513 = vmatprep.subr.bf16.mxu0 0
      %514 = vmatpush1.bf16.msra.mxu0 0
      %515 = vmatprep.subr.bf16.mxu0 0
      %516 = vmatpush1.bf16.msra.mxu0 0
      %517 = vmatprep.subr.bf16.mxu0 0
      %518 = vmatpush1.bf16.msra.mxu0 0
      %519 = vmatprep.subr.bf16.mxu0 0
      %520 = vmatpush1.bf16.msra.mxu0 0
      %521 = vmatprep.subr.bf16.mxu0 0
      %522 = vmatpush1.bf16.msra.mxu0 0
      %523 = vmatprep.subr.bf16.mxu0 0
      %524 = vmatpush1.bf16.msra.mxu0 0
      %525 = vmatprep.subr.bf16.mxu0 0
      %526 = vmatpush1.bf16.msra.mxu0 0
      %527 = vmatprep.subr.bf16.mxu0 0
      %528 = vmatpush1.bf16.msra.mxu0 0
      %529 = vmatprep.mubr.bf16.mxu0 0
      %530 = vmatmul.mubr.bf16.gmra.mrb[0].mxu0 %v413
      %v531 = vpop.f32.mrb[0].mxu0
      %v532 = vadd.f32 0.0, %v531
      %v533 = vpop.f32.mrb[0].mxu0
      %v534 = vadd.f32 0.0, %v533
      %v535 = vpop.f32.mrb[0].mxu0
      %v536 = vpop.f32.mrb[0].mxu0
      %537 = vdwg.mxu0
      %538 = vmatprep.subr.bf16.mxu0 %v370
      %539 = vmatpush1.bf16.msra.mxu0 %v369
      %540 = vmatprep.subr.bf16.mxu0 %v378
      %541 = vmatpush1.bf16.msra.mxu0 %v377
      %542 = vmatprep.subr.bf16.mxu0 %v386
      %543 = vmatpush1.bf16.msra.mxu0 %v385
      %544 = vmatprep.subr.bf16.mxu0 0
      %545 = vmatpush1.bf16.msra.mxu0 0
      %546 = vmatprep.subr.bf16.mxu0 0
      %547 = vmatpush1.bf16.msra.mxu0 0
      %548 = vmatprep.subr.bf16.mxu0 0
      %549 = vmatpush1.bf16.msra.mxu0 0
      %550 = vmatprep.subr.bf16.mxu0 0
      %551 = vmatpush1.bf16.msra.mxu0 0
      %552 = vmatprep.subr.bf16.mxu0 0
      %553 = vmatpush1.bf16.msra.mxu0 0
      %554 = vmatprep.subr.bf16.mxu0 0
      %555 = vmatpush1.bf16.msra.mxu0 0
      %556 = vmatprep.subr.bf16.mxu0 0
      %557 = vmatpush1.bf16.msra.mxu0 0
      %558 = vmatprep.subr.bf16.mxu0 0
      %559 = vmatpush1.bf16.msra.mxu0 0
      %560 = vmatprep.subr.bf16.mxu0 0
      %561 = vmatpush1.bf16.msra.mxu0 0
      %562 = vmatprep.subr.bf16.mxu0 0
      %563 = vmatpush1.bf16.msra.mxu0 0
      %564 = vmatprep.subr.bf16.mxu0 0
      %565 = vmatpush1.bf16.msra.mxu0 0
      %566 = vmatprep.subr.bf16.mxu0 0
      %567 = vmatpush1.bf16.msra.mxu0 0
      %568 = vmatprep.subr.bf16.mxu0 0
      %569 = vmatpush1.bf16.msra.mxu0 0
      %570 = vmatprep.mubr.bf16.mxu0 0
      %571 = vmatmul.mubr.bf16.gmra.mrb[0].mxu0 %v413
      %v572 = vpop.f32.mrb[0].mxu0
      %v573 = vadd.f32 0.0, %v572
      %v574 = vpop.f32.mrb[0].mxu0
      %v575 = vadd.f32 0.0, %v574
      %v576 = vpop.f32.mrb[0].mxu0
      %v577 = vpop.f32.mrb[0].mxu0
      %578 = vdwg.mxu0
      %v579 = vpack.c.bf16 %v450, %v450
      %v580 = vpack.c.bf16 %v452, %v452
      %v581 = vpack.c.bf16 %v491, %v491
      %v582 = vpack.c.bf16 %v493, %v493
      %v583 = vpack.c.bf16 %v532, %v532
      %v584 = vpack.c.bf16 %v534, %v534
      %v585 = vpack.c.bf16 %v573, %v573
      %v586 = vpack.c.bf16 %v575, %v575
      %v595 = vunpack.c.l.b16 %v579
      %v596 = vunpack.c.l.b16 %v580
      %v597 = vunpack.c.l.b16 %v581
      %v598 = vunpack.c.l.b16 %v582
      %v599 = vunpack.c.l.b16 %v583
      %v600 = vunpack.c.l.b16 %v584
      %v601 = vunpack.c.l.b16 %v585
      %v602 = vunpack.c.l.b16 %v586
      %v603 = vpack.c.b16 %v596, %v595
      %v604 = vpack.c.b16 %v598, %v597
      %v605 = vpack.c.b16 %v600, %v599
      %v606 = vpack.c.b16 %v602, %v601
      %611 = vst [vmem:[%s248] sm:$0xff] %v603
      %612 = vst [vmem:[%s248 + $0x8] sm:$0xff] %v604
      %613 = vst [vmem:[%s248 + $0x10] sm:$0xff] %v605
      %614 = vst [vmem:[%s248 + $0x18] sm:$0xff] %v606
      %v615 = vld [vmem:[%s253] sm:$0xff]
      %v616 = vadd.f32 %v450, %v452
      %v617 = vadd.f32 %v616, %v491
      %v618 = vadd.f32 %v617, %v493
      %v619 = vadd.f32 %v618, %v532
      %v620 = vadd.f32 %v619, %v534
      %v621 = vadd.f32 %v620, %v573
      %v622 = vadd.f32 %v621, %v575
      %623 = vadd.xlane.f32.xlu0 %v622
      %v624 = vpop.xlane.xlu0 %623
      %v625 = vadd.f32 %v615, %v624
      %vm626 = vcmask 7168
      %627 = vst.msk [vmem:[%s253] sm:$0xff] %vm626, %v625
      %v628 = vld [vmem:[%s257] sm:$0xff]
      %v629 = vmul.f32 %v450, %v450
      %v630 = vmul.f32 %v452, %v452
      %v631 = vmul.f32 %v491, %v491
      %v632 = vmul.f32 %v493, %v493
      %v633 = vmul.f32 %v532, %v532
      %v634 = vmul.f32 %v534, %v534
      %v635 = vmul.f32 %v573, %v573
      %v636 = vmul.f32 %v575, %v575
      %v637 = vadd.f32 %v629, %v630
      %v638 = vadd.f32 %v637, %v631
      %v639 = vadd.f32 %v638, %v632
      %v640 = vadd.f32 %v639, %v633
      %v641 = vadd.f32 %v640, %v634
      %v642 = vadd.f32 %v641, %v635
      %v643 = vadd.f32 %v642, %v636
      %644 = vadd.xlane.f32.xlu0 %v643
      %v645 = vpop.xlane.xlu0 %644
      %v646 = vadd.f32 %v628, %v645
      %647 = vst.msk [vmem:[%s257] sm:$0xff] %vm626, %v646
      %s648 = smul.u32 8, %s21
      %p649 = scmp.lt.s32.totalorder %s20, 1
      %s650 = scalar_select %p649, %s20, 1
      %p651 = scmp.lt.s32.totalorder %s648, 7
      %s652 = scalar_select %p651, %s648, 7
      %s653 = smul.addr %s650, 8
      %s654 = sadd.s32 %s652, %s653
      %s655 = smul.addr %s654, 4
      %s656 = scalar_lea.vmem %s2, %s655
      %p657 = scmp.lt.s32.totalorder %s20, 1
      %s658 = scalar_select %p657, %s20, 1
      %s659 = smul.addr %s658, 8
      %s660 = scalar_lea.vmem %s3, %s659
      %p661 = scmp.lt.s32.totalorder %s20, 1
      %s662 = scalar_select %p661, %s20, 1
      %s663 = smul.addr %s662, 8
      %s664 = scalar_lea.vmem %s4, %s663
      // Predicated region
      $region33: #{conv_block_t_forward.2} parent=27 // pred_check
        %p665 = pneg %p97
      $region34: #{conv_block_t_forward.2} parent=27 // pred_check_branch
        %667 = sbr.rel (%p665) target = $region36
      $region35: #{conv_block_t_forward.2} parent=27 // pred_region
        %s668 = smul.u32 8, %s21
      $region36: #{conv_block_t_forward.2} parent=27 // pred_fallthru
        _
      // Predicated region
      $region37: #{conv_block_t_forward.2} parent=27 // pred_check
        %p669 = pneg %p123
      $region38: #{conv_block_t_forward.2} parent=27 // pred_check_branch
        %671 = sbr.rel (%p669) target = $region40
      $region39: #{conv_block_t_forward.2} parent=27 // pred_region
        _
      $region40: #{conv_block_t_forward.2} parent=27 // pred_fallthru
        _
      // Predicated region
      $region41: #{conv_block_t_forward.2} parent=27 // pred_check
        %p672 = pneg %p149
      $region42: #{conv_block_t_forward.2} parent=27 // pred_check_branch
        %674 = sbr.rel (%p672) target = $region44
      $region43: #{conv_block_t_forward.2} parent=27 // pred_region
        _
      $region44: #{conv_block_t_forward.2} parent=27 // pred_fallthru
        _
    $region28: #{conv_block_t_forward.2} parent=5 // pred_fallthru
      _
    %p675 = scmp.le.s32.totalorder 2, %s11
    // Predicated region
    $region45: #{conv_block_t_forward.2} parent=5 // pred_check
      %p676 = pneg %p675
    $region46: #{conv_block_t_forward.2} parent=5 // pred_check_branch
      %678 = sbr.rel (%p676) target = $region48
    $region47: #{conv_block_t_forward.2} parent=5 // pred_region
      %s679 = ssub.s32 %s11, 2
      // Predicated region
      $region49: #{conv_block_t_forward.2} parent=47 // pred_check
        %p680 = pneg %p103
      $region50: #{conv_block_t_forward.2} parent=47 // pred_check_branch
        %682 = sbr.rel (%p680) target = $region52
      $region51: #{conv_block_t_forward.2} parent=47 // pred_region
        %s683 = smul.u32 8, %s23
        %p684 = scmp.lt.s32.totalorder %s22, 1
        %s685 = scalar_select %p684, %s22, 1
        %p686 = scmp.lt.s32.totalorder %s683, 7
        %s687 = scalar_select %p686, %s683, 7
        %s688 = smul.addr %s685, 8
        %s689 = sadd.s32 %s687, %s688
        %s690 = smul.addr %s689, 4
        %s691 = scalar_lea.vmem %s2, %s690
      $region52: #{conv_block_t_forward.2} parent=47 // pred_fallthru
        _
      // Predicated region
      $region53: #{conv_block_t_forward.2} parent=47 // pred_check
        %p692 = pneg %p129
      $region54: #{conv_block_t_forward.2} parent=47 // pred_check_branch
        %694 = sbr.rel (%p692) target = $region56
      $region55: #{conv_block_t_forward.2} parent=47 // pred_region
        %p695 = scmp.lt.s32.totalorder %s22, 1
        %s696 = scalar_select %p695, %s22, 1
        %s697 = smul.addr %s696, 8
        %s698 = scalar_lea.vmem %s3, %s697
      $region56: #{conv_block_t_forward.2} parent=47 // pred_fallthru
        _
      // Predicated region
      $region57: #{conv_block_t_forward.2} parent=47 // pred_check
        %p699 = pneg %p155
      $region58: #{conv_block_t_forward.2} parent=47 // pred_check_branch
        %701 = sbr.rel (%p699) target = $region60
      $region59: #{conv_block_t_forward.2} parent=47 // pred_region
        %p702 = scmp.lt.s32.totalorder %s22, 1
        %s703 = scalar_select %p702, %s22, 1
        %s704 = smul.addr %s703, 8
        %s705 = scalar_lea.vmem %s4, %s704
      $region60: #{conv_block_t_forward.2} parent=47 // pred_fallthru
        _
    $region48: #{conv_block_t_forward.2} parent=5 // pred_fallthru
      _
  $region6: #{conv_block_t_forward.2} parent=0 // loop_footer
    %s15 = sadd.s32 1, %s11
  $region7: #{conv_block_t_forward.2} parent=0 // loop_footer_branch
    %10 = sbr.rel target = $region3
  $region8: #{conv_block_t_forward.2} parent=0 // loop_exit
    _

</llo_original>
